<compile_context>
chip_gen: v5e
topology: v5e:2x2
jax: 0.10.0
libtpu: 0.0.40
codegen_flags: <defaults>
</compile_context>

<pallas_src>
import math

import jax
import jax.numpy as jnp
import numpy as np
from jax.experimental import pallas as pl
from jax.experimental.pallas import tpu as pltpu

# ---------------- configuration (small, deterministic) ----------------
M = 16            # batch (rows of x)
D = 4             # feature dim of x
DH = D // 2       # coupling split size
H = 32            # hidden width of the s/t MLPs
NUM_FLOWS = 4
OUT_ROWS = 8      # packed output slab rows (sublane-dense: multiple of 8)
BLOCK_M = 128     # lanes per grid step (lane-dense; sweep 256-512 at scale)


# ---------------- Pallas kernel ----------------
def nf_kernel(x_ref,        # (D, BM)      x^T tile: batch on lanes
              w1_ref,       # (F, 2H, DH)  fused first-stage weight (transposed)
              b1_ref,       # (F, 2H, 1)
              w2_ref,       # (F, 2DH, 2H) block-diagonal second-stage weight
              b2_ref,       # (F, 2DH, 1)
              mu_ref,       # (D, 1)
              prec_ref,     # (D, D)
              const_ref,    # (1, 1) in SMEM: MVN log-normalization constant
              out_ref):     # (OUT_ROWS, BM): [z^T ; logp ; logdet ; pad]
    x = x_ref[...].astype(jnp.float32)            # (D, BM)
    bm = x.shape[1]

    # split once; ping-pong the two halves across flows (no per-flow concat).
    top = x[:DH, :]                               # (DH, BM)
    bot = x[DH:, :]                               # (DH, BM)
    ld = jnp.zeros((1, bm), jnp.float32)

    # statically unrolled flow loop (matches the PyTorch for-loop over flows)
    for k in range(NUM_FLOWS):
        x1 = top if k % 2 == 0 else bot           # conditioner input
        x2 = bot if k % 2 == 0 else top           # transformed half

        w1k = w1_ref[k]                           # (2H, DH)
        b1k = b1_ref[k]                           # (2H, 1)
        w2k = w2_ref[k]                           # (2DH, 2H)
        b2k = b2_ref[k]                           # (2DH, 1)

        # first stage, K = DH = 2: VPU broadcast-FMAs (no tiny-K MXU push)
        pre = b1k + w1k[:, 0:1] * x1[0:1, :]      # (2H, BM)
        for dd in range(1, DH):
            pre = pre + w1k[:, dd:dd + 1] * x1[dd:dd + 1, :]
        hidden = jnp.tanh(pre)                    # (2H, BM): [h_s ; h_t], one EUP launch

        # second stage: block-diagonal weight gives [s ; t] in one MXU dot
        st = jnp.dot(w2k, hidden,
                     preferred_element_type=jnp.float32) + b2k   # (2DH, BM)
        s = st[:DH, :]
        t = st[DH:, :]

        y2 = x2 * jnp.exp(s) + t
        if k % 2 == 0:
            bot = y2                              # x = [x1, y2]
        else:
            top = y2                              # x = [y2, x1]

        ld = ld + jnp.sum(s, axis=0, keepdims=True)

    z = jnp.concatenate([top, bot], axis=0)       # (D, BM) -- single interleave

    # prior log_prob: MVN(mu, Sigma) via precision matrix, kept off the MXU
    diff = z - mu_ref[...]                        # (D, BM)
    pd = prec_ref[:, 0:1] * diff[0:1, :]          # prec @ diff via FMAs
    for dd in range(1, D):
        pd = pd + prec_ref[:, dd:dd + 1] * diff[dd:dd + 1, :]
    quad = jnp.sum(pd * diff, axis=0, keepdims=True)        # (1, BM)
    logp = -0.5 * quad + const_ref[0, 0]

    # single lane/sublane-dense store: [z^T ; logp ; logdet ; zero pad]
    pad = jnp.zeros((OUT_ROWS - D - 2, bm), jnp.float32)
    out_ref[...] = jnp.concatenate([z, logp, ld, pad], axis=0).astype(out_ref.dtype)


# ---------------- one-time parameter packing (hoisted out of per-call path) ----------------
def pack_flow_params(params):
    """Pack raw per-flow MLP weights into the fused layouts the kernel expects."""
    (w1s, b1s, w2s, b2s, w1t, b1t, w2t, b2t) = params

    # Fused first stage: concat scale/translate hidden units, contraction dim last.
    w1c = jnp.concatenate([w1s, w1t], axis=2)                 # (F, DH, 2H)
    w1cT = jnp.swapaxes(w1c, 1, 2)                            # (F, 2H, DH)
    b1c = jnp.concatenate([b1s, b1t], axis=1)[..., None]      # (F, 2H, 1)

    # Fused second stage: block-diagonal so one matmul yields [s ; t].
    w2sT = jnp.swapaxes(w2s, 1, 2)                            # (F, DH, H)
    w2tT = jnp.swapaxes(w2t, 1, 2)                            # (F, DH, H)
    zblk = jnp.zeros_like(w2sT)
    w2c = jnp.concatenate([
        jnp.concatenate([w2sT, zblk], axis=2),                # (F, DH, 2H)
        jnp.concatenate([zblk, w2tT], axis=2),                # (F, DH, 2H)
    ], axis=1)                                                # (F, 2DH, 2H)
    b2c = jnp.concatenate([b2s, b2t], axis=1)[..., None]      # (F, 2DH, 1)

    return (w1cT, b1c, w2c, b2c)


# ---------------- wrapper ----------------
def normalizing_flow_forward(x, packed_params, mu, prec, lognorm_const,
                             block_m=BLOCK_M):
    """x: (m, d) as in the PyTorch module. Returns (z, prior_logprob, log_det)."""
    m, d = x.shape
    assert d == D
    w1cT, b1c, w2c, b2c = packed_params

    mu_arr = jnp.asarray(mu, jnp.float32)
    assert mu_arr.size == D
    mu_col = mu_arr.reshape(-1)[:, None]                      # (D, 1), layout-safe
    prec_f32 = jnp.asarray(prec, jnp.float32)
    const = jnp.asarray(lognorm_const, jnp.float32).reshape(1, 1)

    # batch on lanes; zero-pad to a multiple of the lane tile
    bm = block_m
    m_pad = pl.cdiv(m, bm) * bm
    xT = jnp.asarray(x, jnp.float32).T                        # (D, m)
    if m_pad != m:
        xT = jnp.pad(xT, ((0, 0), (0, m_pad - m)))

    def _full(shape):
        return pl.BlockSpec(tuple(shape), lambda i: (0,) * len(shape))

    out = pl.pallas_call(
        nf_kernel,
        out_shape=jax.ShapeDtypeStruct((OUT_ROWS, m_pad), jnp.float32),
        grid=(m_pad // bm,),
        in_specs=[
            pl.BlockSpec((D, bm), lambda i: (0, i)),          # x^T tile
            _full(w1cT.shape),                                # grid-invariant weights
            _full(b1c.shape),
            _full(w2c.shape),
            _full(b2c.shape),
            _full(mu_col.shape),
            _full(prec_f32.shape),
            pl.BlockSpec(memory_space=pltpu.MemorySpace.SMEM),  # lognorm const scalar
        ],
        out_specs=pl.BlockSpec((OUT_ROWS, bm), lambda i: (0, i)),
        compiler_params=pltpu.CompilerParams(
            dimension_semantics=("parallel",)),
    )(xT, w1cT, b1c, w2c, b2c, mu_col, prec_f32, const)

    # unpack the slab; drop pad lanes; match PyTorch return shapes
    z = out[:D, :m].T                                         # (m, d)
    prior_logprob = out[D, :m]                                # (m,)
    log_det = out[D + 1, :m]                                  # (m,)
    return z, prior_logprob, log_det


# ---------------- pure-JAX reference (same math, original layout) ----------------
def reference_forward(x, params, mu, prec, lognorm_const):
    (w1s, b1s, w2s, b2s, w1t, b1t, w2t, b2t) = params
    ld = jnp.zeros((x.shape[0],), jnp.float32)
    for k in range(NUM_FLOWS):
        if k % 2 == 0:
            x1, x2 = x[:, :DH], x[:, DH:]
        else:
            x1, x2 = x[:, DH:], x[:, :DH]
        s = jnp.tanh(x1 @ w1s[k] + b1s[k]) @ w2s[k] + b2s[k]
        t = jnp.tanh(x1 @ w1t[k] + b1t[k]) @ w2t[k] + b2t[k]
        y2 = x2 * jnp.exp(s) + t
        x = jnp.concatenate([x1, y2], -1) if k % 2 == 0 else jnp.concatenate([y2, x1], -1)
        ld = ld + jnp.sum(s, axis=-1)
    diff = x - mu
    logp = -0.5 * jnp.sum((diff @ prec) * diff, axis=-1) + lognorm_const
    return x, logp, ld


if __name__ == "__main__":
    key = jax.random.PRNGKey(0)
    keys = jax.random.split(key, 10)

    # deterministic parameter init (small scale so exp(s) is tame)
    w1s = 0.3 * jax.random.normal(keys[0], (NUM_FLOWS, DH, H), jnp.float32)
    b1s = 0.1 * jax.random.normal(keys[1], (NUM_FLOWS, H), jnp.float32)
    w2s = 0.3 * jax.random.normal(keys[2], (NUM_FLOWS, H, DH), jnp.float32)
    b2s = 0.1 * jax.random.normal(keys[3], (NUM_FLOWS, DH), jnp.float32)
    w1t = 0.3 * jax.random.normal(keys[4], (NUM_FLOWS, DH, H), jnp.float32)
    b1t = 0.1 * jax.random.normal(keys[5], (NUM_FLOWS, H), jnp.float32)
    w2t = 0.3 * jax.random.normal(keys[6], (NUM_FLOWS, H, DH), jnp.float32)
    b2t = 0.1 * jax.random.normal(keys[7], (NUM_FLOWS, DH), jnp.float32)
    params = (w1s, b1s, w2s, b2s, w1t, b1t, w2t, b2t)

    # prior: MultivariateNormal(mu, Sigma); here Sigma = I, mu = 0
    mu = jnp.zeros((1, D), jnp.float32)
    sigma = jnp.eye(D, dtype=jnp.float32)
    prec = jnp.linalg.inv(sigma)
    _, logdet_sigma = jnp.linalg.slogdet(sigma)
    lognorm_const = float(-0.5 * D * math.log(2.0 * math.pi) - 0.5 * float(logdet_sigma))

    x = jax.random.normal(keys[8], (M, D), jnp.float32)

    # pack weights once (hoisted out of the per-call path)
    packed = pack_flow_params(params)
    packed = jax.block_until_ready(packed)

    z, prior_logprob, log_det = normalizing_flow_forward(
        x, packed, mu, prec, lognorm_const)
    jax.block_until_ready((z, prior_logprob, log_det))

    z_ref, logp_ref, ld_ref = reference_forward(x, params, mu, prec, lognorm_const)
    np.testing.assert_allclose(np.asarray(z), np.asarray(z_ref), rtol=1e-4, atol=1e-5)
    np.testing.assert_allclose(np.asarray(prior_logprob), np.asarray(logp_ref),
                               rtol=1e-4, atol=1e-5)
    np.testing.assert_allclose(np.asarray(log_det), np.asarray(ld_ref),
                               rtol=1e-4, atol=1e-5)

    print("KERNEL_OK")
</pallas_src>

<mosaic_0001>
module attributes {stable_mosaic.version = 11 : i64} {
  func.func @nf_kernel(%arg0: i32, %arg1: memref<4x128xf32, #tpu.memory_space<vmem>>, %arg2: memref<4x64x2xf32, #tpu.memory_space<vmem>>, %arg3: memref<4x64x1xf32, #tpu.memory_space<vmem>>, %arg4: memref<4x4x64xf32, #tpu.memory_space<vmem>>, %arg5: memref<4x4x1xf32, #tpu.memory_space<vmem>>, %arg6: memref<4x1xf32, #tpu.memory_space<vmem>>, %arg7: memref<4x4xf32, #tpu.memory_space<vmem>>, %arg8: memref<1x1xf32, #tpu.memory_space<smem>>, %arg9: memref<8x128xf32, #tpu.memory_space<vmem>>) attributes {dimension_semantics = [#tpu.dimension_semantics<parallel>], iteration_bounds = array<i64: 1>, scalar_prefetch = 0 : i64, scratch_operands = 0 : i64, tpu.core_type = #tpu.core_type<tc>, window_params = [{transform_indices = @transform_0, window_bounds = array<i64: 4, 128>}, {pipeline_mode = #tpu.pipeline_mode<synchronous>, transform_indices = @transform_1, window_bounds = array<i64: 4, 64, 2>}, {pipeline_mode = #tpu.pipeline_mode<synchronous>, transform_indices = @transform_2, window_bounds = array<i64: 4, 64, 1>}, {pipeline_mode = #tpu.pipeline_mode<synchronous>, transform_indices = @transform_3, window_bounds = array<i64: 4, 4, 64>}, {pipeline_mode = #tpu.pipeline_mode<synchronous>, transform_indices = @transform_4, window_bounds = array<i64: 4, 4, 1>}, {pipeline_mode = #tpu.pipeline_mode<synchronous>, transform_indices = @transform_5, window_bounds = array<i64: 4, 1>}, {pipeline_mode = #tpu.pipeline_mode<synchronous>, transform_indices = @transform_6, window_bounds = array<i64: 4, 4>}, {transform_indices = @transform_7, window_bounds = array<i64: 1, 1>}, {transform_indices = @transform_8, window_bounds = array<i64: 8, 128>}]} {
    %c0 = arith.constant 0 : index
    %c0_0 = arith.constant 0 : index
    %0 = vector.load %arg1[%c0, %c0_0] : memref<4x128xf32, #tpu.memory_space<vmem>>, vector<4x128xf32>
    %1 = vector.extract_strided_slice %0 {offsets = [0, 0], sizes = [2, 128], strides = [1, 1]} : vector<4x128xf32> to vector<2x128xf32>
    %2 = vector.extract_strided_slice %0 {offsets = [2, 0], sizes = [2, 128], strides = [1, 1]} : vector<4x128xf32> to vector<2x128xf32>
    %cst = arith.constant 0.000000e+00 : f32
    %3 = vector.broadcast %cst : f32 to vector<1x128xf32>
    %c0_1 = arith.constant 0 : index
    %c0_2 = arith.constant 0 : index
    %c0_3 = arith.constant 0 : index
    %4 = vector.load %arg2[%c0_1, %c0_2, %c0_3] : memref<4x64x2xf32, #tpu.memory_space<vmem>>, vector<1x64x2xf32>
    %5 = vector.shape_cast %4 : vector<1x64x2xf32> to vector<64x2xf32>
    %c0_4 = arith.constant 0 : index
    %c0_5 = arith.constant 0 : index
    %c0_6 = arith.constant 0 : index
    %6 = vector.load %arg3[%c0_4, %c0_5, %c0_6] : memref<4x64x1xf32, #tpu.memory_space<vmem>>, vector<1x64x1xf32>
    %7 = vector.shape_cast %6 : vector<1x64x1xf32> to vector<64x1xf32>
    %c0_7 = arith.constant 0 : index
    %c0_8 = arith.constant 0 : index
    %c0_9 = arith.constant 0 : index
    %8 = vector.load %arg4[%c0_7, %c0_8, %c0_9] : memref<4x4x64xf32, #tpu.memory_space<vmem>>, vector<1x4x64xf32>
    %9 = vector.shape_cast %8 : vector<1x4x64xf32> to vector<4x64xf32>
    %c0_10 = arith.constant 0 : index
    %c0_11 = arith.constant 0 : index
    %c0_12 = arith.constant 0 : index
    %10 = vector.load %arg5[%c0_10, %c0_11, %c0_12] : memref<4x4x1xf32, #tpu.memory_space<vmem>>, vector<1x4x1xf32>
    %11 = vector.shape_cast %10 : vector<1x4x1xf32> to vector<4x1xf32>
    %12 = vector.extract_strided_slice %5 {offsets = [0, 0], sizes = [64, 1], strides = [1, 1]} : vector<64x2xf32> to vector<64x1xf32>
    %13 = vector.extract_strided_slice %1 {offsets = [0, 0], sizes = [1, 128], strides = [1, 1]} : vector<2x128xf32> to vector<1x128xf32>
    %14 = vector.broadcast %12 : vector<64x1xf32> to vector<64x128xf32>
    %15 = vector.broadcast %13 : vector<1x128xf32> to vector<64x128xf32>
    %16 = arith.mulf %14, %15 : vector<64x128xf32>
    %17 = vector.broadcast %7 : vector<64x1xf32> to vector<64x128xf32>
    %18 = arith.addf %17, %16 : vector<64x128xf32>
    %19 = vector.extract_strided_slice %5 {offsets = [0, 1], sizes = [64, 1], strides = [1, 1]} : vector<64x2xf32> to vector<64x1xf32>
    %20 = vector.extract_strided_slice %1 {offsets = [1, 0], sizes = [1, 128], strides = [1, 1]} : vector<2x128xf32> to vector<1x128xf32>
    %21 = vector.broadcast %19 : vector<64x1xf32> to vector<64x128xf32>
    %22 = vector.broadcast %20 : vector<1x128xf32> to vector<64x128xf32>
    %23 = arith.mulf %21, %22 : vector<64x128xf32>
    %24 = arith.addf %18, %23 : vector<64x128xf32>
    %25 = math.tanh %24 : vector<64x128xf32>
    %cst_13 = arith.constant dense<0.000000e+00> : vector<4x128xf32>
    %26 = tpu.matmul %9, %25, %cst_13 {dimension_numbers = #tpu.dot_dimension_numbers<[1], [0], [0], [1], [0, 0, 1, 1], [], []>} : vector<4x64xf32>, vector<64x128xf32>, vector<4x128xf32> -> vector<4x128xf32>
    %27 = vector.broadcast %11 : vector<4x1xf32> to vector<4x128xf32>
    %28 = arith.addf %26, %27 : vector<4x128xf32>
    %29 = vector.extract_strided_slice %28 {offsets = [0, 0], sizes = [2, 128], strides = [1, 1]} : vector<4x128xf32> to vector<2x128xf32>
    %30 = vector.extract_strided_slice %28 {offsets = [2, 0], sizes = [2, 128], strides = [1, 1]} : vector<4x128xf32> to vector<2x128xf32>
    %31 = math.exp %29 : vector<2x128xf32>
    %32 = arith.mulf %2, %31 : vector<2x128xf32>
    %33 = arith.addf %32, %30 : vector<2x128xf32>
    %cst_14 = arith.constant dense<0.000000e+00> : vector<128xf32>
    %34 = vector.multi_reduction <add>, %29, %cst_14 [0] : vector<2x128xf32> to vector<128xf32>
    %35 = vector.shape_cast %34 : vector<128xf32> to vector<1x128xf32>
    %36 = arith.addf %3, %35 : vector<1x128xf32>
    %c1 = arith.constant 1 : index
    %c0_15 = arith.constant 0 : index
    %c0_16 = arith.constant 0 : index
    %37 = vector.load %arg2[%c1, %c0_15, %c0_16] : memref<4x64x2xf32, #tpu.memory_space<vmem>>, vector<1x64x2xf32>
    %38 = vector.shape_cast %37 : vector<1x64x2xf32> to vector<64x2xf32>
    %c1_17 = arith.constant 1 : index
    %c0_18 = arith.constant 0 : index
    %c0_19 = arith.constant 0 : index
    %39 = vector.load %arg3[%c1_17, %c0_18, %c0_19] : memref<4x64x1xf32, #tpu.memory_space<vmem>>, vector<1x64x1xf32>
    %40 = vector.shape_cast %39 : vector<1x64x1xf32> to vector<64x1xf32>
    %c1_20 = arith.constant 1 : index
    %c0_21 = arith.constant 0 : index
    %c0_22 = arith.constant 0 : index
    %41 = vector.load %arg4[%c1_20, %c0_21, %c0_22] : memref<4x4x64xf32, #tpu.memory_space<vmem>>, vector<1x4x64xf32>
    %42 = vector.shape_cast %41 : vector<1x4x64xf32> to vector<4x64xf32>
    %c1_23 = arith.constant 1 : index
    %c0_24 = arith.constant 0 : index
    %c0_25 = arith.constant 0 : index
    %43 = vector.load %arg5[%c1_23, %c0_24, %c0_25] : memref<4x4x1xf32, #tpu.memory_space<vmem>>, vector<1x4x1xf32>
    %44 = vector.shape_cast %43 : vector<1x4x1xf32> to vector<4x1xf32>
    %45 = vector.extract_strided_slice %38 {offsets = [0, 0], sizes = [64, 1], strides = [1, 1]} : vector<64x2xf32> to vector<64x1xf32>
    %46 = vector.extract_strided_slice %33 {offsets = [0, 0], sizes = [1, 128], strides = [1, 1]} : vector<2x128xf32> to vector<1x128xf32>
    %47 = vector.broadcast %45 : vector<64x1xf32> to vector<64x128xf32>
    %48 = vector.broadcast %46 : vector<1x128xf32> to vector<64x128xf32>
    %49 = arith.mulf %47, %48 : vector<64x128xf32>
    %50 = vector.broadcast %40 : vector<64x1xf32> to vector<64x128xf32>
    %51 = arith.addf %50, %49 : vector<64x128xf32>
    %52 = vector.extract_strided_slice %38 {offsets = [0, 1], sizes = [64, 1], strides = [1, 1]} : vector<64x2xf32> to vector<64x1xf32>
    %53 = vector.extract_strided_slice %33 {offsets = [1, 0], sizes = [1, 128], strides = [1, 1]} : vector<2x128xf32> to vector<1x128xf32>
    %54 = vector.broadcast %52 : vector<64x1xf32> to vector<64x128xf32>
    %55 = vector.broadcast %53 : vector<1x128xf32> to vector<64x128xf32>
    %56 = arith.mulf %54, %55 : vector<64x128xf32>
    %57 = arith.addf %51, %56 : vector<64x128xf32>
    %58 = math.tanh %57 : vector<64x128xf32>
    %cst_26 = arith.constant dense<0.000000e+00> : vector<4x128xf32>
    %59 = tpu.matmul %42, %58, %cst_26 {dimension_numbers = #tpu.dot_dimension_numbers<[1], [0], [0], [1], [0, 0, 1, 1], [], []>} : vector<4x64xf32>, vector<64x128xf32>, vector<4x128xf32> -> vector<4x128xf32>
    %60 = vector.broadcast %44 : vector<4x1xf32> to vector<4x128xf32>
    %61 = arith.addf %59, %60 : vector<4x128xf32>
    %62 = vector.extract_strided_slice %61 {offsets = [0, 0], sizes = [2, 128], strides = [1, 1]} : vector<4x128xf32> to vector<2x128xf32>
    %63 = vector.extract_strided_slice %61 {offsets = [2, 0], sizes = [2, 128], strides = [1, 1]} : vector<4x128xf32> to vector<2x128xf32>
    %64 = math.exp %62 : vector<2x128xf32>
    %65 = arith.mulf %1, %64 : vector<2x128xf32>
    %66 = arith.addf %65, %63 : vector<2x128xf32>
    %cst_27 = arith.constant dense<0.000000e+00> : vector<128xf32>
    %67 = vector.multi_reduction <add>, %62, %cst_27 [0] : vector<2x128xf32> to vector<128xf32>
    %68 = vector.shape_cast %67 : vector<128xf32> to vector<1x128xf32>
    %69 = arith.addf %36, %68 : vector<1x128xf32>
    %c2 = arith.constant 2 : index
    %c0_28 = arith.constant 0 : index
    %c0_29 = arith.constant 0 : index
    %70 = vector.load %arg2[%c2, %c0_28, %c0_29] : memref<4x64x2xf32, #tpu.memory_space<vmem>>, vector<1x64x2xf32>
    %71 = vector.shape_cast %70 : vector<1x64x2xf32> to vector<64x2xf32>
    %c2_30 = arith.constant 2 : index
    %c0_31 = arith.constant 0 : index
    %c0_32 = arith.constant 0 : index
    %72 = vector.load %arg3[%c2_30, %c0_31, %c0_32] : memref<4x64x1xf32, #tpu.memory_space<vmem>>, vector<1x64x1xf32>
    %73 = vector.shape_cast %72 : vector<1x64x1xf32> to vector<64x1xf32>
    %c2_33 = arith.constant 2 : index
    %c0_34 = arith.constant 0 : index
    %c0_35 = arith.constant 0 : index
    %74 = vector.load %arg4[%c2_33, %c0_34, %c0_35] : memref<4x4x64xf32, #tpu.memory_space<vmem>>, vector<1x4x64xf32>
    %75 = vector.shape_cast %74 : vector<1x4x64xf32> to vector<4x64xf32>
    %c2_36 = arith.constant 2 : index
    %c0_37 = arith.constant 0 : index
    %c0_38 = arith.constant 0 : index
    %76 = vector.load %arg5[%c2_36, %c0_37, %c0_38] : memref<4x4x1xf32, #tpu.memory_space<vmem>>, vector<1x4x1xf32>
    %77 = vector.shape_cast %76 : vector<1x4x1xf32> to vector<4x1xf32>
    %78 = vector.extract_strided_slice %71 {offsets = [0, 0], sizes = [64, 1], strides = [1, 1]} : vector<64x2xf32> to vector<64x1xf32>
    %79 = vector.extract_strided_slice %66 {offsets = [0, 0], sizes = [1, 128], strides = [1, 1]} : vector<2x128xf32> to vector<1x128xf32>
    %80 = vector.broadcast %78 : vector<64x1xf32> to vector<64x128xf32>
    %81 = vector.broadcast %79 : vector<1x128xf32> to vector<64x128xf32>
    %82 = arith.mulf %80, %81 : vector<64x128xf32>
    %83 = vector.broadcast %73 : vector<64x1xf32> to vector<64x128xf32>
    %84 = arith.addf %83, %82 : vector<64x128xf32>
    %85 = vector.extract_strided_slice %71 {offsets = [0, 1], sizes = [64, 1], strides = [1, 1]} : vector<64x2xf32> to vector<64x1xf32>
    %86 = vector.extract_strided_slice %66 {offsets = [1, 0], sizes = [1, 128], strides = [1, 1]} : vector<2x128xf32> to vector<1x128xf32>
    %87 = vector.broadcast %85 : vector<64x1xf32> to vector<64x128xf32>
    %88 = vector.broadcast %86 : vector<1x128xf32> to vector<64x128xf32>
    %89 = arith.mulf %87, %88 : vector<64x128xf32>
    %90 = arith.addf %84, %89 : vector<64x128xf32>
    %91 = math.tanh %90 : vector<64x128xf32>
    %cst_39 = arith.constant dense<0.000000e+00> : vector<4x128xf32>
    %92 = tpu.matmul %75, %91, %cst_39 {dimension_numbers = #tpu.dot_dimension_numbers<[1], [0], [0], [1], [0, 0, 1, 1], [], []>} : vector<4x64xf32>, vector<64x128xf32>, vector<4x128xf32> -> vector<4x128xf32>
    %93 = vector.broadcast %77 : vector<4x1xf32> to vector<4x128xf32>
    %94 = arith.addf %92, %93 : vector<4x128xf32>
    %95 = vector.extract_strided_slice %94 {offsets = [0, 0], sizes = [2, 128], strides = [1, 1]} : vector<4x128xf32> to vector<2x128xf32>
    %96 = vector.extract_strided_slice %94 {offsets = [2, 0], sizes = [2, 128], strides = [1, 1]} : vector<4x128xf32> to vector<2x128xf32>
    %97 = math.exp %95 : vector<2x128xf32>
    %98 = arith.mulf %33, %97 : vector<2x128xf32>
    %99 = arith.addf %98, %96 : vector<2x128xf32>
    %cst_40 = arith.constant dense<0.000000e+00> : vector<128xf32>
    %100 = vector.multi_reduction <add>, %95, %cst_40 [0] : vector<2x128xf32> to vector<128xf32>
    %101 = vector.shape_cast %100 : vector<128xf32> to vector<1x128xf32>
    %102 = arith.addf %69, %101 : vector<1x128xf32>
    %c3 = arith.constant 3 : index
    %c0_41 = arith.constant 0 : index
    %c0_42 = arith.constant 0 : index
    %103 = vector.load %arg2[%c3, %c0_41, %c0_42] : memref<4x64x2xf32, #tpu.memory_space<vmem>>, vector<1x64x2xf32>
    %104 = vector.shape_cast %103 : vector<1x64x2xf32> to vector<64x2xf32>
    %c3_43 = arith.constant 3 : index
    %c0_44 = arith.constant 0 : index
    %c0_45 = arith.constant 0 : index
    %105 = vector.load %arg3[%c3_43, %c0_44, %c0_45] : memref<4x64x1xf32, #tpu.memory_space<vmem>>, vector<1x64x1xf32>
    %106 = vector.shape_cast %105 : vector<1x64x1xf32> to vector<64x1xf32>
    %c3_46 = arith.constant 3 : index
    %c0_47 = arith.constant 0 : index
    %c0_48 = arith.constant 0 : index
    %107 = vector.load %arg4[%c3_46, %c0_47, %c0_48] : memref<4x4x64xf32, #tpu.memory_space<vmem>>, vector<1x4x64xf32>
    %108 = vector.shape_cast %107 : vector<1x4x64xf32> to vector<4x64xf32>
    %c3_49 = arith.constant 3 : index
    %c0_50 = arith.constant 0 : index
    %c0_51 = arith.constant 0 : index
    %109 = vector.load %arg5[%c3_49, %c0_50, %c0_51] : memref<4x4x1xf32, #tpu.memory_space<vmem>>, vector<1x4x1xf32>
    %110 = vector.shape_cast %109 : vector<1x4x1xf32> to vector<4x1xf32>
    %111 = vector.extract_strided_slice %104 {offsets = [0, 0], sizes = [64, 1], strides = [1, 1]} : vector<64x2xf32> to vector<64x1xf32>
    %112 = vector.extract_strided_slice %99 {offsets = [0, 0], sizes = [1, 128], strides = [1, 1]} : vector<2x128xf32> to vector<1x128xf32>
    %113 = vector.broadcast %111 : vector<64x1xf32> to vector<64x128xf32>
    %114 = vector.broadcast %112 : vector<1x128xf32> to vector<64x128xf32>
    %115 = arith.mulf %113, %114 : vector<64x128xf32>
    %116 = vector.broadcast %106 : vector<64x1xf32> to vector<64x128xf32>
    %117 = arith.addf %116, %115 : vector<64x128xf32>
    %118 = vector.extract_strided_slice %104 {offsets = [0, 1], sizes = [64, 1], strides = [1, 1]} : vector<64x2xf32> to vector<64x1xf32>
    %119 = vector.extract_strided_slice %99 {offsets = [1, 0], sizes = [1, 128], strides = [1, 1]} : vector<2x128xf32> to vector<1x128xf32>
    %120 = vector.broadcast %118 : vector<64x1xf32> to vector<64x128xf32>
    %121 = vector.broadcast %119 : vector<1x128xf32> to vector<64x128xf32>
    %122 = arith.mulf %120, %121 : vector<64x128xf32>
    %123 = arith.addf %117, %122 : vector<64x128xf32>
    %124 = math.tanh %123 : vector<64x128xf32>
    %cst_52 = arith.constant dense<0.000000e+00> : vector<4x128xf32>
    %125 = tpu.matmul %108, %124, %cst_52 {dimension_numbers = #tpu.dot_dimension_numbers<[1], [0], [0], [1], [0, 0, 1, 1], [], []>} : vector<4x64xf32>, vector<64x128xf32>, vector<4x128xf32> -> vector<4x128xf32>
    %126 = vector.broadcast %110 : vector<4x1xf32> to vector<4x128xf32>
    %127 = arith.addf %125, %126 : vector<4x128xf32>
    %128 = vector.extract_strided_slice %127 {offsets = [0, 0], sizes = [2, 128], strides = [1, 1]} : vector<4x128xf32> to vector<2x128xf32>
    %129 = vector.extract_strided_slice %127 {offsets = [2, 0], sizes = [2, 128], strides = [1, 1]} : vector<4x128xf32> to vector<2x128xf32>
    %130 = math.exp %128 : vector<2x128xf32>
    %131 = arith.mulf %66, %130 : vector<2x128xf32>
    %132 = arith.addf %131, %129 : vector<2x128xf32>
    %cst_53 = arith.constant dense<0.000000e+00> : vector<128xf32>
    %133 = vector.multi_reduction <add>, %128, %cst_53 [0] : vector<2x128xf32> to vector<128xf32>
    %134 = vector.shape_cast %133 : vector<128xf32> to vector<1x128xf32>
    %135 = arith.addf %102, %134 : vector<1x128xf32>
    %136 = tpu.concatenate %132, %99 in 0 : vector<2x128xf32>, vector<2x128xf32> -> vector<4x128xf32>
    %c0_54 = arith.constant 0 : index
    %c0_55 = arith.constant 0 : index
    %137 = vector.load %arg6[%c0_54, %c0_55] : memref<4x1xf32, #tpu.memory_space<vmem>>, vector<4x1xf32>
    %138 = vector.broadcast %137 : vector<4x1xf32> to vector<4x128xf32>
    %139 = arith.subf %136, %138 : vector<4x128xf32>
    %c0_56 = arith.constant 0 : index
    %c0_57 = arith.constant 0 : index
    %140 = vector.load %arg7[%c0_56, %c0_57] : memref<4x4xf32, #tpu.memory_space<vmem>>, vector<4x1xf32>
    %141 = vector.extract_strided_slice %139 {offsets = [0, 0], sizes = [1, 128], strides = [1, 1]} : vector<4x128xf32> to vector<1x128xf32>
    %142 = vector.broadcast %140 : vector<4x1xf32> to vector<4x128xf32>
    %143 = vector.broadcast %141 : vector<1x128xf32> to vector<4x128xf32>
    %144 = arith.mulf %142, %143 : vector<4x128xf32>
    %c0_58 = arith.constant 0 : index
    %c1_59 = arith.constant 1 : index
    %145 = vector.load %arg7[%c0_58, %c1_59] : memref<4x4xf32, #tpu.memory_space<vmem>>, vector<4x1xf32>
    %146 = vector.extract_strided_slice %139 {offsets = [1, 0], sizes = [1, 128], strides = [1, 1]} : vector<4x128xf32> to vector<1x128xf32>
    %147 = vector.broadcast %145 : vector<4x1xf32> to vector<4x128xf32>
    %148 = vector.broadcast %146 : vector<1x128xf32> to vector<4x128xf32>
    %149 = arith.mulf %147, %148 : vector<4x128xf32>
    %150 = arith.addf %144, %149 : vector<4x128xf32>
    %c0_60 = arith.constant 0 : index
    %c2_61 = arith.constant 2 : index
    %151 = vector.load %arg7[%c0_60, %c2_61] : memref<4x4xf32, #tpu.memory_space<vmem>>, vector<4x1xf32>
    %152 = vector.extract_strided_slice %139 {offsets = [2, 0], sizes = [1, 128], strides = [1, 1]} : vector<4x128xf32> to vector<1x128xf32>
    %153 = vector.broadcast %151 : vector<4x1xf32> to vector<4x128xf32>
    %154 = vector.broadcast %152 : vector<1x128xf32> to vector<4x128xf32>
    %155 = arith.mulf %153, %154 : vector<4x128xf32>
    %156 = arith.addf %150, %155 : vector<4x128xf32>
    %c0_62 = arith.constant 0 : index
    %c3_63 = arith.constant 3 : index
    %157 = vector.load %arg7[%c0_62, %c3_63] : memref<4x4xf32, #tpu.memory_space<vmem>>, vector<4x1xf32>
    %158 = vector.extract_strided_slice %139 {offsets = [3, 0], sizes = [1, 128], strides = [1, 1]} : vector<4x128xf32> to vector<1x128xf32>
    %159 = vector.broadcast %157 : vector<4x1xf32> to vector<4x128xf32>
    %160 = vector.broadcast %158 : vector<1x128xf32> to vector<4x128xf32>
    %161 = arith.mulf %159, %160 : vector<4x128xf32>
    %162 = arith.addf %156, %161 : vector<4x128xf32>
    %163 = arith.mulf %162, %139 : vector<4x128xf32>
    %cst_64 = arith.constant dense<0.000000e+00> : vector<128xf32>
    %164 = vector.multi_reduction <add>, %163, %cst_64 [0] : vector<4x128xf32> to vector<128xf32>
    %165 = vector.shape_cast %164 : vector<128xf32> to vector<1x128xf32>
    %cst_65 = arith.constant -5.000000e-01 : f32
    %166 = vector.broadcast %cst_65 : f32 to vector<1x128xf32>
    %167 = arith.mulf %166, %165 : vector<1x128xf32>
    %c0_66 = arith.constant 0 : index
    %c0_67 = arith.constant 0 : index
    %168 = memref.load %arg8[%c0_66, %c0_67] : memref<1x1xf32, #tpu.memory_space<smem>>
    %169 = vector.broadcast %168 : f32 to vector<1x128xf32>
    %170 = arith.addf %167, %169 : vector<1x128xf32>
    %cst_68 = arith.constant 0.000000e+00 : f32
    %171 = vector.broadcast %cst_68 : f32 to vector<2x128xf32>
    %172 = tpu.concatenate %136, %170, %135, %171 in 0 : vector<4x128xf32>, vector<1x128xf32>, vector<1x128xf32>, vector<2x128xf32> -> vector<8x128xf32>
    %c0_69 = arith.constant 0 : index
    %c0_70 = arith.constant 0 : index
    %173 = vector.load %arg9[%c0_69, %c0_70] : memref<8x128xf32, #tpu.memory_space<vmem>>, vector<8x128xf32>
    tpu.vector_store %arg9[%c0_69, %c0_70], %172 {strides = array<i32>} : memref<8x128xf32, #tpu.memory_space<vmem>>, vector<8x128xf32>,
    return
  }
  func.func @transform_0(%arg0: i32) -> (i32, i32) {
    %c0_i32 = arith.constant 0 : i32
    %c0_i32_0 = arith.constant 0 : i32
    return %c0_i32, %arg0 : i32, i32
  }
  func.func @transform_1(%arg0: i32) -> (i32, i32, i32) {
    %c0_i32 = arith.constant 0 : i32
    %c0_i32_0 = arith.constant 0 : i32
    %c0_i32_1 = arith.constant 0 : i32
    %c0_i32_2 = arith.constant 0 : i32
    return %c0_i32, %c0_i32_0, %c0_i32_1 : i32, i32, i32
  }
  func.func @transform_2(%arg0: i32) -> (i32, i32, i32) {
    %c0_i32 = arith.constant 0 : i32
    %c0_i32_0 = arith.constant 0 : i32
    %c0_i32_1 = arith.constant 0 : i32
    %c0_i32_2 = arith.constant 0 : i32
    return %c0_i32, %c0_i32_0, %c0_i32_1 : i32, i32, i32
  }
  func.func @transform_3(%arg0: i32) -> (i32, i32, i32) {
    %c0_i32 = arith.constant 0 : i32
    %c0_i32_0 = arith.constant 0 : i32
    %c0_i32_1 = arith.constant 0 : i32
    %c0_i32_2 = arith.constant 0 : i32
    return %c0_i32, %c0_i32_0, %c0_i32_1 : i32, i32, i32
  }
  func.func @transform_4(%arg0: i32) -> (i32, i32, i32) {
    %c0_i32 = arith.constant 0 : i32
    %c0_i32_0 = arith.constant 0 : i32
    %c0_i32_1 = arith.constant 0 : i32
    %c0_i32_2 = arith.constant 0 : i32
    return %c0_i32, %c0_i32_0, %c0_i32_1 : i32, i32, i32
  }
  func.func @transform_5(%arg0: i32) -> (i32, i32) {
    %c0_i32 = arith.constant 0 : i32
    %c0_i32_0 = arith.constant 0 : i32
    %c0_i32_1 = arith.constant 0 : i32
    return %c0_i32, %c0_i32_0 : i32, i32
  }
  func.func @transform_6(%arg0: i32) -> (i32, i32) {
    %c0_i32 = arith.constant 0 : i32
    %c0_i32_0 = arith.constant 0 : i32
    %c0_i32_1 = arith.constant 0 : i32
    return %c0_i32, %c0_i32_0 : i32, i32
  }
  func.func @transform_7(%arg0: i32) -> (i32, i32) {
    %c0_i32 = arith.constant 0 : i32
    %c0_i32_0 = arith.constant 0 : i32
    %c0_i32_1 = arith.constant 0 : i32
    return %c0_i32, %c0_i32_0 : i32, i32
  }
  func.func @transform_8(%arg0: i32) -> (i32, i32) {
    %c0_i32 = arith.constant 0 : i32
    %c0_i32_0 = arith.constant 0 : i32
    return %c0_i32, %arg0 : i32, i32
  }
}

</mosaic_0001>

<llo_original>
// kernel: tpu_custom_call.1
$region0: #{tpu_custom_call.1}
  #allocation0 [shape = 'u32[]', space=smem, size = 0x4, offset = 0x4, fixed_abs, tag = 'smem constant byte address 0x4 - core index']
  #allocation1 [shape = 'u32[72,128]{1,0:T(1,128)}', space=vmem, size = 0x9000, scoped, tag = 'internal scratch']
  #allocation2 [shape = 'f32[1,1]{1,0:T(1,128)S(6)}', space=smem, size = 0x200, scoped, tag = 'scoped memory for tpu_custom_call.1']
  %s0 = inlined_call_operand.vmem [shape: f32[4,128], index: 0, kind: input, shape index: {}]
  %s1 = inlined_call_operand.vmem [shape: f32[4,64,2], index: 1, kind: input, shape index: {}]
  %s2 = inlined_call_operand.vmem [shape: f32[4,64,1], index: 2, kind: input, shape index: {}]
  %s3 = inlined_call_operand.vmem [shape: f32[4,4,64], index: 3, kind: input, shape index: {}]
  %s4 = inlined_call_operand.vmem [shape: f32[4,4,1], index: 4, kind: input, shape index: {}]
  %s5 = inlined_call_operand.vmem [shape: f32[4,1], index: 5, kind: input, shape index: {}]
  %s6 = inlined_call_operand.vmem [shape: f32[4,4], index: 6, kind: input, shape index: {}]
  %s7 = inlined_call_operand.<no memory space> [shape: f32[1,1], index: 7, kind: input, shape index: {}]
  %s8 = inlined_call_operand.hbm [shape: f32[8,128], index: 8, kind: output, shape index: {}]
  %s9 = sld [smem:[#allocation0]]
  $region42: #{tpu_custom_call.1} parent=0
    _
  %s11 = ssub.s32 1, %s9
  %s12 = scalar_select 0, %s11, %s9
  %13 = sst [smem:[#allocation2]] %s7
  $region1: #{tpu_custom_call.1} parent=0
    #allocation3 [shape = 'u8[4096]{0}', space=vmem, size = 0x1000, scoped, tag = 'output window, operand 0, single buffered']
    #allocation4 [shape = 's32[1]{0}', space=sflag, size = 0x4, scoped, tag = 'scoped memory for tpu_custom_call.1']
    %14 = vsyncpa [#allocation4], 0
    // Predicated region
    $region2: #{tpu_custom_call.1} parent=1 // pred_check
      _
    $region3: #{tpu_custom_call.1} parent=1 // pred_check_branch
      %16 = sbr.rel (0) target = $region5
    $region4: #{tpu_custom_call.1} parent=1 // pred_region
      _
    $region5: #{tpu_custom_call.1} parent=1 // pred_fallthru
      _
    // Predicated region
    $region6: #{tpu_custom_call.1} parent=1 // pred_check
      _
    $region7: #{tpu_custom_call.1} parent=1 // pred_check_branch
      %18 = sbr.rel (0) target = $region9
    $region8: #{tpu_custom_call.1} parent=1 // pred_region
      _
    $region9: #{tpu_custom_call.1} parent=1 // pred_fallthru
      _
    // Predicated region
    $region10: #{tpu_custom_call.1} parent=1 // pred_check
      _
    $region11: #{tpu_custom_call.1} parent=1 // pred_check_branch
      %20 = sbr.rel (0) target = $region13
    $region12: #{tpu_custom_call.1} parent=1 // pred_region
      _
    $region13: #{tpu_custom_call.1} parent=1 // pred_fallthru
      _
    // Predicated region
    $region14: #{tpu_custom_call.1} parent=1 // pred_check
      _
    $region15: #{tpu_custom_call.1} parent=1 // pred_check_branch
      %22 = sbr.rel (0) target = $region17
    $region16: #{tpu_custom_call.1} parent=1 // pred_region
      _
    $region17: #{tpu_custom_call.1} parent=1 // pred_fallthru
      _
    // Predicated region
    $region18: #{tpu_custom_call.1} parent=1 // pred_check
      _
    $region19: #{tpu_custom_call.1} parent=1 // pred_check_branch
      %24 = sbr.rel (0) target = $region21
    $region20: #{tpu_custom_call.1} parent=1 // pred_region
      _
    $region21: #{tpu_custom_call.1} parent=1 // pred_fallthru
      _
    // Predicated region
    $region22: #{tpu_custom_call.1} parent=1 // pred_check
      _
    $region23: #{tpu_custom_call.1} parent=1 // pred_check_branch
      %26 = sbr.rel (0) target = $region25
    $region24: #{tpu_custom_call.1} parent=1 // pred_region
      _
    $region25: #{tpu_custom_call.1} parent=1 // pred_fallthru
      _
    // Predicated region
    $region26: #{tpu_custom_call.1} parent=1 // pred_check
      _
    $region27: #{tpu_custom_call.1} parent=1 // pred_check_branch
      %28 = sbr.rel (0) target = $region29
    $region28: #{tpu_custom_call.1} parent=1 // pred_region
      _
    $region29: #{tpu_custom_call.1} parent=1 // pred_fallthru
      _
    // Predicated region
    $region30: #{tpu_custom_call.1} parent=1 // pred_check
      _
    $region31: #{tpu_custom_call.1} parent=1 // pred_check_branch
      %30 = sbr.rel (0) target = $region33
    $region32: #{tpu_custom_call.1} parent=1 // pred_region
      _
    $region33: #{tpu_custom_call.1} parent=1 // pred_fallthru
      _
    %v31 = vld [vmem:[%s0] sm:$0xf]
    %v32 = vld [vmem:[%s1] sm:$0xff]
    %v33 = vld [vmem:[%s1 + $0x8] sm:$0xff]
    %v34 = vld [vmem:[%s1 + $0x10] sm:$0xff]
    %v35 = vld [vmem:[%s1 + $0x18] sm:$0xff]
    %v36 = vld [vmem:[%s1 + $0x20] sm:$0xff]
    %v37 = vld [vmem:[%s1 + $0x28] sm:$0xff]
    %v38 = vld [vmem:[%s1 + $0x30] sm:$0xff]
    %v39 = vld [vmem:[%s1 + $0x38] sm:$0xff]
    %v40 = vld [vmem:[%s2] sm:$0xff]
    %v41 = vld [vmem:[%s2 + $0x8] sm:$0xff]
    %v42 = vld [vmem:[%s2 + $0x10] sm:$0xff]
    %v43 = vld [vmem:[%s2 + $0x18] sm:$0xff]
    %v44 = vld [vmem:[%s2 + $0x20] sm:$0xff]
    %v45 = vld [vmem:[%s2 + $0x28] sm:$0xff]
    %v46 = vld [vmem:[%s2 + $0x30] sm:$0xff]
    %v47 = vld [vmem:[%s2 + $0x38] sm:$0xff]
    %v48 = vld [vmem:[%s3] sm:$0xf]
    %v49 = vld [vmem:[%s4] sm:$0xf]
    %51 = vset.pattern.permute.xlu0 0
    %52 = vperm.xlu0 %51, %v32
    %v53 = vpop.permute.xlu0 %52
    %56 = vset.pattern.permute.xlu0 0
    %57 = vperm.xlu0 %56, %v33
    %v58 = vpop.permute.xlu0 %57
    %61 = vset.pattern.permute.xlu0 0
    %62 = vperm.xlu0 %61, %v34
    %v63 = vpop.permute.xlu0 %62
    %66 = vset.pattern.permute.xlu0 0
    %67 = vperm.xlu0 %66, %v35
    %v68 = vpop.permute.xlu0 %67
    %71 = vset.pattern.permute.xlu0 0
    %72 = vperm.xlu0 %71, %v36
    %v73 = vpop.permute.xlu0 %72
    %76 = vset.pattern.permute.xlu0 0
    %77 = vperm.xlu0 %76, %v37
    %v78 = vpop.permute.xlu0 %77
    %81 = vset.pattern.permute.xlu0 0
    %82 = vperm.xlu0 %81, %v38
    %v83 = vpop.permute.xlu0 %82
    %86 = vset.pattern.permute.xlu0 0
    %87 = vperm.xlu0 %86, %v39
    %v88 = vpop.permute.xlu0 %87
    %v90 = vperm.slane %v31, 0
    %v91 = vmul.f32 %v53, %v90
    %v92 = vmul.f32 %v58, %v90
    %v93 = vmul.f32 %v63, %v90
    %v94 = vmul.f32 %v68, %v90
    %v95 = vmul.f32 %v73, %v90
    %v96 = vmul.f32 %v78, %v90
    %v97 = vmul.f32 %v83, %v90
    %v98 = vmul.f32 %v88, %v90
    %100 = vset.pattern.permute.xlu0 0
    %101 = vperm.xlu0 %100, %v40
    %v102 = vpop.permute.xlu0 %101
    %105 = vset.pattern.permute.xlu0 0
    %106 = vperm.xlu0 %105, %v41
    %v107 = vpop.permute.xlu0 %106
    %110 = vset.pattern.permute.xlu0 0
    %111 = vperm.xlu0 %110, %v42
    %v112 = vpop.permute.xlu0 %111
    %115 = vset.pattern.permute.xlu0 0
    %116 = vperm.xlu0 %115, %v43
    %v117 = vpop.permute.xlu0 %116
    %120 = vset.pattern.permute.xlu0 0
    %121 = vperm.xlu0 %120, %v44
    %v122 = vpop.permute.xlu0 %121
    %125 = vset.pattern.permute.xlu0 0
    %126 = vperm.xlu0 %125, %v45
    %v127 = vpop.permute.xlu0 %126
    %130 = vset.pattern.permute.xlu0 0
    %131 = vperm.xlu0 %130, %v46
    %v132 = vpop.permute.xlu0 %131
    %135 = vset.pattern.permute.xlu0 0
    %136 = vperm.xlu0 %135, %v47
    %v137 = vpop.permute.xlu0 %136
    %v139 = vadd.f32 %v102, %v91
    %v140 = vadd.f32 %v107, %v92
    %v141 = vadd.f32 %v112, %v93
    %v142 = vadd.f32 %v117, %v94
    %v143 = vadd.f32 %v122, %v95
    %v144 = vadd.f32 %v127, %v96
    %v145 = vadd.f32 %v132, %v97
    %v146 = vadd.f32 %v137, %v98
    %147 = vset.pattern.permute.xlu0 1
    %148 = vperm.xlu0 %147, %v32
    %v149 = vpop.permute.xlu0 %148
    %151 = vset.pattern.permute.xlu0 1
    %152 = vperm.xlu0 %151, %v33
    %v153 = vpop.permute.xlu0 %152
    %155 = vset.pattern.permute.xlu0 1
    %156 = vperm.xlu0 %155, %v34
    %v157 = vpop.permute.xlu0 %156
    %159 = vset.pattern.permute.xlu0 1
    %160 = vperm.xlu0 %159, %v35
    %v161 = vpop.permute.xlu0 %160
    %163 = vset.pattern.permute.xlu0 1
    %164 = vperm.xlu0 %163, %v36
    %v165 = vpop.permute.xlu0 %164
    %167 = vset.pattern.permute.xlu0 1
    %168 = vperm.xlu0 %167, %v37
    %v169 = vpop.permute.xlu0 %168
    %171 = vset.pattern.permute.xlu0 1
    %172 = vperm.xlu0 %171, %v38
    %v173 = vpop.permute.xlu0 %172
    %175 = vset.pattern.permute.xlu0 1
    %176 = vperm.xlu0 %175, %v39
    %v177 = vpop.permute.xlu0 %176
    %v179 = vperm.slane %v31, 1
    %v180 = vmul.f32 %v149, %v179
    %v181 = vmul.f32 %v153, %v179
    %v182 = vmul.f32 %v157, %v179
    %v183 = vmul.f32 %v161, %v179
    %v184 = vmul.f32 %v165, %v179
    %v185 = vmul.f32 %v169, %v179
    %v186 = vmul.f32 %v173, %v179
    %v187 = vmul.f32 %v177, %v179
    %v188 = vadd.f32 %v139, %v180
    %v189 = vadd.f32 %v140, %v181
    %v190 = vadd.f32 %v141, %v182
    %v191 = vadd.f32 %v142, %v183
    %v192 = vadd.f32 %v143, %v184
    %v193 = vadd.f32 %v144, %v185
    %v194 = vadd.f32 %v145, %v186
    %v195 = vadd.f32 %v146, %v187
    %v196 = vtanh.pop %v188
    %v197 = vtanh.pop %v189
    %v198 = vtanh.pop %v190
    %v199 = vtanh.pop %v191
    %v200 = vtanh.pop %v192
    %v201 = vtanh.pop %v193
    %v202 = vtanh.pop %v194
    %v203 = vtanh.pop %v195
    %205 = vset.pattern.permute.xlu0 0
    %206 = vperm.xlu0 %205, %v49
    %v207 = vpop.permute.xlu0 %206
    %vm209 = vcmask 523264
    %v211 = vsel %vm209, %v48, 0
    %213 = vmatpush.msra.mxu0 0.0
    %214 = vmatpush.msra.mxu0 0.0
    %215 = vmatpush.msra.mxu0 0.0
    %216 = vmatpush.msra.mxu0 0.0
    %217 = vmatpush.msra.mxu0 0.0
    %218 = vmatpush.msra.mxu0 0.0
    %219 = vmatpush.msra.mxu0 0.0
    %220 = vmatpush.msra.mxu0 0.0
    %221 = vmatpush.msra.mxu0 %v203
    %222 = vmatpush.msra.mxu0 %v202
    %223 = vmatpush.msra.mxu0 %v201
    %224 = vmatpush.msra.mxu0 %v200
    %225 = vmatpush.msra.mxu0 %v199
    %226 = vmatpush.msra.mxu0 %v198
    %227 = vmatpush.msra.mxu0 %v197
    %228 = vmatpush.msra.mxu0 %v196
    %229 = vmatmul.f32.gmra.mxu0 %v211
    %v230 = vpop.f32.mrf.mxu0
    %v231 = vadd.f32 %v207, %v230
    %232 = vdwg.mxu0
    %v233 = vmul.f32 %v231, 1.442695
    %v234 = vpow.pop %v233
    %v236 = vrot.slane %v234, 6
    %v238 = vmul.f32 %v31, %v236
    %v239 = vadd.f32 %v238, %v231
    %vm240 = vcmask 1041408
    %v241 = vsel %vm240, %v231, 0.0
    %v242 = vrot.slane %v241, 4
    %v243 = vadd.f32 %v241, %v242
    %v244 = vrot.slane %v243, 2
    %v245 = vadd.f32 %v243, %v244
    %v246 = vrot.slane %v245, 1
    %v247 = vadd.f32 %v245, %v246
    %v248 = vadd.f32 %v247, 0.0
    %s249 = scalar_lea.vmem %s1, 64
    %v250 = vld [vmem:[%s249] sm:$0xff]
    %v251 = vld [vmem:[%s249 + $0x8] sm:$0xff]
    %v252 = vld [vmem:[%s249 + $0x10] sm:$0xff]
    %v253 = vld [vmem:[%s249 + $0x18] sm:$0xff]
    %v254 = vld [vmem:[%s249 + $0x20] sm:$0xff]
    %v255 = vld [vmem:[%s249 + $0x28] sm:$0xff]
    %v256 = vld [vmem:[%s249 + $0x30] sm:$0xff]
    %v257 = vld [vmem:[%s249 + $0x38] sm:$0xff]
    %s258 = scalar_lea.vmem %s2, 64
    %v259 = vld [vmem:[%s258] sm:$0xff]
    %v260 = vld [vmem:[%s258 + $0x8] sm:$0xff]
    %v261 = vld [vmem:[%s258 + $0x10] sm:$0xff]
    %v262 = vld [vmem:[%s258 + $0x18] sm:$0xff]
    %v263 = vld [vmem:[%s258 + $0x20] sm:$0xff]
    %v264 = vld [vmem:[%s258 + $0x28] sm:$0xff]
    %v265 = vld [vmem:[%s258 + $0x30] sm:$0xff]
    %v266 = vld [vmem:[%s258 + $0x38] sm:$0xff]
    %s267 = scalar_lea.vmem %s3, 4
    %v268 = vld [vmem:[%s267] sm:$0xf]
    %s269 = scalar_lea.vmem %s4, 4
    %v270 = vld [vmem:[%s269] sm:$0xf]
    %272 = vset.pattern.permute.xlu0 0
    %273 = vperm.xlu0 %272, %v250
    %v274 = vpop.permute.xlu0 %273
    %277 = vset.pattern.permute.xlu0 0
    %278 = vperm.xlu0 %277, %v251
    %v279 = vpop.permute.xlu0 %278
    %282 = vset.pattern.permute.xlu0 0
    %283 = vperm.xlu0 %282, %v252
    %v284 = vpop.permute.xlu0 %283
    %287 = vset.pattern.permute.xlu0 0
    %288 = vperm.xlu0 %287, %v253
    %v289 = vpop.permute.xlu0 %288
    %292 = vset.pattern.permute.xlu0 0
    %293 = vperm.xlu0 %292, %v254
    %v294 = vpop.permute.xlu0 %293
    %297 = vset.pattern.permute.xlu0 0
    %298 = vperm.xlu0 %297, %v255
    %v299 = vpop.permute.xlu0 %298
    %302 = vset.pattern.permute.xlu0 0
    %303 = vperm.xlu0 %302, %v256
    %v304 = vpop.permute.xlu0 %303
    %307 = vset.pattern.permute.xlu0 0
    %308 = vperm.xlu0 %307, %v257
    %v309 = vpop.permute.xlu0 %308
    %v311 = vperm.slane %v239, 2
    %v312 = vmul.f32 %v274, %v311
    %v313 = vmul.f32 %v279, %v311
    %v314 = vmul.f32 %v284, %v311
    %v315 = vmul.f32 %v289, %v311
    %v316 = vmul.f32 %v294, %v311
    %v317 = vmul.f32 %v299, %v311
    %v318 = vmul.f32 %v304, %v311
    %v319 = vmul.f32 %v309, %v311
    %321 = vset.pattern.permute.xlu0 0
    %322 = vperm.xlu0 %321, %v259
    %v323 = vpop.permute.xlu0 %322
    %326 = vset.pattern.permute.xlu0 0
    %327 = vperm.xlu0 %326, %v260
    %v328 = vpop.permute.xlu0 %327
    %331 = vset.pattern.permute.xlu0 0
    %332 = vperm.xlu0 %331, %v261
    %v333 = vpop.permute.xlu0 %332
    %336 = vset.pattern.permute.xlu0 0
    %337 = vperm.xlu0 %336, %v262
    %v338 = vpop.permute.xlu0 %337
    %341 = vset.pattern.permute.xlu0 0
    %342 = vperm.xlu0 %341, %v263
    %v343 = vpop.permute.xlu0 %342
    %346 = vset.pattern.permute.xlu0 0
    %347 = vperm.xlu0 %346, %v264
    %v348 = vpop.permute.xlu0 %347
    %351 = vset.pattern.permute.xlu0 0
    %352 = vperm.xlu0 %351, %v265
    %v353 = vpop.permute.xlu0 %352
    %356 = vset.pattern.permute.xlu0 0
    %357 = vperm.xlu0 %356, %v266
    %v358 = vpop.permute.xlu0 %357
    %v360 = vadd.f32 %v323, %v312
    %v361 = vadd.f32 %v328, %v313
    %v362 = vadd.f32 %v333, %v314
    %v363 = vadd.f32 %v338, %v315
    %v364 = vadd.f32 %v343, %v316
    %v365 = vadd.f32 %v348, %v317
    %v366 = vadd.f32 %v353, %v318
    %v367 = vadd.f32 %v358, %v319
    %368 = vset.pattern.permute.xlu0 1
    %369 = vperm.xlu0 %368, %v250
    %v370 = vpop.permute.xlu0 %369
    %372 = vset.pattern.permute.xlu0 1
    %373 = vperm.xlu0 %372, %v251
    %v374 = vpop.permute.xlu0 %373
    %376 = vset.pattern.permute.xlu0 1
    %377 = vperm.xlu0 %376, %v252
    %v378 = vpop.permute.xlu0 %377
    %380 = vset.pattern.permute.xlu0 1
    %381 = vperm.xlu0 %380, %v253
    %v382 = vpop.permute.xlu0 %381
    %384 = vset.pattern.permute.xlu0 1
    %385 = vperm.xlu0 %384, %v254
    %v386 = vpop.permute.xlu0 %385
    %388 = vset.pattern.permute.xlu0 1
    %389 = vperm.xlu0 %388, %v255
    %v390 = vpop.permute.xlu0 %389
    %392 = vset.pattern.permute.xlu0 1
    %393 = vperm.xlu0 %392, %v256
    %v394 = vpop.permute.xlu0 %393
    %396 = vset.pattern.permute.xlu0 1
    %397 = vperm.xlu0 %396, %v257
    %v398 = vpop.permute.xlu0 %397
    %v400 = vperm.slane %v239, 3
    %v401 = vmul.f32 %v370, %v400
    %v402 = vmul.f32 %v374, %v400
    %v403 = vmul.f32 %v378, %v400
    %v404 = vmul.f32 %v382, %v400
    %v405 = vmul.f32 %v386, %v400
    %v406 = vmul.f32 %v390, %v400
    %v407 = vmul.f32 %v394, %v400
    %v408 = vmul.f32 %v398, %v400
    %v409 = vadd.f32 %v360, %v401
    %v410 = vadd.f32 %v361, %v402
    %v411 = vadd.f32 %v362, %v403
    %v412 = vadd.f32 %v363, %v404
    %v413 = vadd.f32 %v364, %v405
    %v414 = vadd.f32 %v365, %v406
    %v415 = vadd.f32 %v366, %v407
    %v416 = vadd.f32 %v367, %v408
    %v417 = vtanh.pop %v409
    %v418 = vtanh.pop %v410
    %v419 = vtanh.pop %v411
    %v420 = vtanh.pop %v412
    %v421 = vtanh.pop %v413
    %v422 = vtanh.pop %v414
    %v423 = vtanh.pop %v415
    %v424 = vtanh.pop %v416
    %426 = vset.pattern.permute.xlu0 0
    %427 = vperm.xlu0 %426, %v270
    %v428 = vpop.permute.xlu0 %427
    %v431 = vsel %vm209, %v268, 0
    %433 = vmatpush.msra.mxu0 0.0
    %434 = vmatpush.msra.mxu0 0.0
    %435 = vmatpush.msra.mxu0 0.0
    %436 = vmatpush.msra.mxu0 0.0
    %437 = vmatpush.msra.mxu0 0.0
    %438 = vmatpush.msra.mxu0 0.0
    %439 = vmatpush.msra.mxu0 0.0
    %440 = vmatpush.msra.mxu0 0.0
    %441 = vmatpush.msra.mxu0 %v424
    %442 = vmatpush.msra.mxu0 %v423
    %443 = vmatpush.msra.mxu0 %v422
    %444 = vmatpush.msra.mxu0 %v421
    %445 = vmatpush.msra.mxu0 %v420
    %446 = vmatpush.msra.mxu0 %v419
    %447 = vmatpush.msra.mxu0 %v418
    %448 = vmatpush.msra.mxu0 %v417
    %449 = vmatmul.f32.gmra.mxu0 %v431
    %v450 = vpop.f32.mrf.mxu0
    %v451 = vadd.f32 %v428, %v450
    %452 = vdwg.mxu0
    %v453 = vmul.f32 %v451, 1.442695
    %v454 = vpow.pop %v453
    %v455 = vmul.f32 %v31, %v454
    %v457 = vrot.slane %v451, 2
    %v459 = vadd.f32 %v455, %v457
    %v460 = vsel %vm240, %v451, 0.0
    %v461 = vrot.slane %v460, 4
    %v462 = vadd.f32 %v460, %v461
    %v463 = vrot.slane %v462, 2
    %v464 = vadd.f32 %v462, %v463
    %v465 = vrot.slane %v464, 1
    %v466 = vadd.f32 %v464, %v465
    %v467 = vadd.f32 %v248, %v466
    %s468 = scalar_lea.vmem %s1, 128
    %v469 = vld [vmem:[%s468] sm:$0xff]
    %v470 = vld [vmem:[%s468 + $0x8] sm:$0xff]
    %v471 = vld [vmem:[%s468 + $0x10] sm:$0xff]
    %v472 = vld [vmem:[%s468 + $0x18] sm:$0xff]
    %v473 = vld [vmem:[%s468 + $0x20] sm:$0xff]
    %v474 = vld [vmem:[%s468 + $0x28] sm:$0xff]
    %v475 = vld [vmem:[%s468 + $0x30] sm:$0xff]
    %v476 = vld [vmem:[%s468 + $0x38] sm:$0xff]
    %s477 = scalar_lea.vmem %s2, 128
    %v478 = vld [vmem:[%s477] sm:$0xff]
    %v479 = vld [vmem:[%s477 + $0x8] sm:$0xff]
    %v480 = vld [vmem:[%s477 + $0x10] sm:$0xff]
    %v481 = vld [vmem:[%s477 + $0x18] sm:$0xff]
    %v482 = vld [vmem:[%s477 + $0x20] sm:$0xff]
    %v483 = vld [vmem:[%s477 + $0x28] sm:$0xff]
    %v484 = vld [vmem:[%s477 + $0x30] sm:$0xff]
    %v485 = vld [vmem:[%s477 + $0x38] sm:$0xff]
    %s486 = scalar_lea.vmem %s3, 8
    %v487 = vld [vmem:[%s486] sm:$0xf]
    %s488 = scalar_lea.vmem %s4, 8
    %v489 = vld [vmem:[%s488] sm:$0xf]
    %491 = vset.pattern.permute.xlu0 0
    %492 = vperm.xlu0 %491, %v469
    %v493 = vpop.permute.xlu0 %492
    %496 = vset.pattern.permute.xlu0 0
    %497 = vperm.xlu0 %496, %v470
    %v498 = vpop.permute.xlu0 %497
    %501 = vset.pattern.permute.xlu0 0
    %502 = vperm.xlu0 %501, %v471
    %v503 = vpop.permute.xlu0 %502
    %506 = vset.pattern.permute.xlu0 0
    %507 = vperm.xlu0 %506, %v472
    %v508 = vpop.permute.xlu0 %507
    %511 = vset.pattern.permute.xlu0 0
    %512 = vperm.xlu0 %511, %v473
    %v513 = vpop.permute.xlu0 %512
    %516 = vset.pattern.permute.xlu0 0
    %517 = vperm.xlu0 %516, %v474
    %v518 = vpop.permute.xlu0 %517
    %521 = vset.pattern.permute.xlu0 0
    %522 = vperm.xlu0 %521, %v475
    %v523 = vpop.permute.xlu0 %522
    %526 = vset.pattern.permute.xlu0 0
    %527 = vperm.xlu0 %526, %v476
    %v528 = vpop.permute.xlu0 %527
    %v530 = vperm.slane %v459, 0
    %v531 = vmul.f32 %v493, %v530
    %v532 = vmul.f32 %v498, %v530
    %v533 = vmul.f32 %v503, %v530
    %v534 = vmul.f32 %v508, %v530
    %v535 = vmul.f32 %v513, %v530
    %v536 = vmul.f32 %v518, %v530
    %v537 = vmul.f32 %v523, %v530
    %v538 = vmul.f32 %v528, %v530
    %540 = vset.pattern.permute.xlu0 0
    %541 = vperm.xlu0 %540, %v478
    %v542 = vpop.permute.xlu0 %541
    %545 = vset.pattern.permute.xlu0 0
    %546 = vperm.xlu0 %545, %v479
    %v547 = vpop.permute.xlu0 %546
    %550 = vset.pattern.permute.xlu0 0
    %551 = vperm.xlu0 %550, %v480
    %v552 = vpop.permute.xlu0 %551
    %555 = vset.pattern.permute.xlu0 0
    %556 = vperm.xlu0 %555, %v481
    %v557 = vpop.permute.xlu0 %556
    %560 = vset.pattern.permute.xlu0 0
    %561 = vperm.xlu0 %560, %v482
    %v562 = vpop.permute.xlu0 %561
    %565 = vset.pattern.permute.xlu0 0
    %566 = vperm.xlu0 %565, %v483
    %v567 = vpop.permute.xlu0 %566
    %570 = vset.pattern.permute.xlu0 0
    %571 = vperm.xlu0 %570, %v484
    %v572 = vpop.permute.xlu0 %571
    %575 = vset.pattern.permute.xlu0 0
    %576 = vperm.xlu0 %575, %v485
    %v577 = vpop.permute.xlu0 %576
    %v579 = vadd.f32 %v542, %v531
    %v580 = vadd.f32 %v547, %v532
    %v581 = vadd.f32 %v552, %v533
    %v582 = vadd.f32 %v557, %v534
    %v583 = vadd.f32 %v562, %v535
    %v584 = vadd.f32 %v567, %v536
    %v585 = vadd.f32 %v572, %v537
    %v586 = vadd.f32 %v577, %v538
    %587 = vset.pattern.permute.xlu0 1
    %588 = vperm.xlu0 %587, %v469
    %v589 = vpop.permute.xlu0 %588
    %591 = vset.pattern.permute.xlu0 1
    %592 = vperm.xlu0 %591, %v470
    %v593 = vpop.permute.xlu0 %592
    %595 = vset.pattern.permute.xlu0 1
    %596 = vperm.xlu0 %595, %v471
    %v597 = vpop.permute.xlu0 %596
    %599 = vset.pattern.permute.xlu0 1
    %600 = vperm.xlu0 %599, %v472
    %v601 = vpop.permute.xlu0 %600
    %603 = vset.pattern.permute.xlu0 1
    %604 = vperm.xlu0 %603, %v473
    %v605 = vpop.permute.xlu0 %604
    %607 = vset.pattern.permute.xlu0 1
    %608 = vperm.xlu0 %607, %v474
    %v609 = vpop.permute.xlu0 %608
    %611 = vset.pattern.permute.xlu0 1
    %612 = vperm.xlu0 %611, %v475
    %v613 = vpop.permute.xlu0 %612
    %615 = vset.pattern.permute.xlu0 1
    %616 = vperm.xlu0 %615, %v476
    %v617 = vpop.permute.xlu0 %616
    %v619 = vperm.slane %v459, 1
    %v620 = vmul.f32 %v589, %v619
    %v621 = vmul.f32 %v593, %v619
    %v622 = vmul.f32 %v597, %v619
    %v623 = vmul.f32 %v601, %v619
    %v624 = vmul.f32 %v605, %v619
    %v625 = vmul.f32 %v609, %v619
    %v626 = vmul.f32 %v613, %v619
    %v627 = vmul.f32 %v617, %v619
    %v628 = vadd.f32 %v579, %v620
    %v629 = vadd.f32 %v580, %v621
    %v630 = vadd.f32 %v581, %v622
    %v631 = vadd.f32 %v582, %v623
    %v632 = vadd.f32 %v583, %v624
    %v633 = vadd.f32 %v584, %v625
    %v634 = vadd.f32 %v585, %v626
    %v635 = vadd.f32 %v586, %v627
    %v636 = vtanh.pop %v628
    %v637 = vtanh.pop %v629
    %v638 = vtanh.pop %v630
    %v639 = vtanh.pop %v631
    %v640 = vtanh.pop %v632
    %v641 = vtanh.pop %v633
    %v642 = vtanh.pop %v634
    %v643 = vtanh.pop %v635
    %645 = vset.pattern.permute.xlu0 0
    %646 = vperm.xlu0 %645, %v489
    %v647 = vpop.permute.xlu0 %646
    %v650 = vsel %vm209, %v487, 0
    %652 = vmatpush.msra.mxu0 0.0
    %653 = vmatpush.msra.mxu0 0.0
    %654 = vmatpush.msra.mxu0 0.0
    %655 = vmatpush.msra.mxu0 0.0
    %656 = vmatpush.msra.mxu0 0.0
    %657 = vmatpush.msra.mxu0 0.0
    %658 = vmatpush.msra.mxu0 0.0
    %659 = vmatpush.msra.mxu0 0.0
    %660 = vmatpush.msra.mxu0 %v643
    %661 = vmatpush.msra.mxu0 %v642
    %662 = vmatpush.msra.mxu0 %v641
    %663 = vmatpush.msra.mxu0 %v640
    %664 = vmatpush.msra.mxu0 %v639
    %665 = vmatpush.msra.mxu0 %v638
    %666 = vmatpush.msra.mxu0 %v637
    %667 = vmatpush.msra.mxu0 %v636
    %668 = vmatmul.f32.gmra.mxu0 %v650
    %v669 = vpop.f32.mrf.mxu0
    %v670 = vadd.f32 %v647, %v669
    %671 = vdwg.mxu0
    %v672 = vmul.f32 %v670, 1.442695
    %v673 = vpow.pop %v672
    %v675 = vrot.slane %v673, 6
    %v677 = vmul.f32 %v239, %v675
    %v678 = vadd.f32 %v677, %v670
    %v679 = vsel %vm240, %v670, 0.0
    %v680 = vrot.slane %v679, 4
    %v681 = vadd.f32 %v679, %v680
    %v682 = vrot.slane %v681, 2
    %v683 = vadd.f32 %v681, %v682
    %v684 = vrot.slane %v683, 1
    %v685 = vadd.f32 %v683, %v684
    %v686 = vadd.f32 %v467, %v685
    %s687 = scalar_lea.vmem %s1, 192
    %v688 = vld [vmem:[%s687] sm:$0xff]
    %v689 = vld [vmem:[%s687 + $0x8] sm:$0xff]
    %v690 = vld [vmem:[%s687 + $0x10] sm:$0xff]
    %v691 = vld [vmem:[%s687 + $0x18] sm:$0xff]
    %v692 = vld [vmem:[%s687 + $0x20] sm:$0xff]
    %v693 = vld [vmem:[%s687 + $0x28] sm:$0xff]
    %v694 = vld [vmem:[%s687 + $0x30] sm:$0xff]
    %v695 = vld [vmem:[%s687 + $0x38] sm:$0xff]
    %s696 = scalar_lea.vmem %s2, 192
    %v697 = vld [vmem:[%s696] sm:$0xff]
    %v698 = vld [vmem:[%s696 + $0x8] sm:$0xff]
    %v699 = vld [vmem:[%s696 + $0x10] sm:$0xff]
    %v700 = vld [vmem:[%s696 + $0x18] sm:$0xff]
    %v701 = vld [vmem:[%s696 + $0x20] sm:$0xff]
    %v702 = vld [vmem:[%s696 + $0x28] sm:$0xff]
    %v703 = vld [vmem:[%s696 + $0x30] sm:$0xff]
    %v704 = vld [vmem:[%s696 + $0x38] sm:$0xff]
    %s705 = scalar_lea.vmem %s3, 12
    %v706 = vld [vmem:[%s705] sm:$0xf]
    %s707 = scalar_lea.vmem %s4, 12
    %v708 = vld [vmem:[%s707] sm:$0xf]
    %710 = vset.pattern.permute.xlu0 0
    %711 = vperm.xlu0 %710, %v688
    %v712 = vpop.permute.xlu0 %711
    %715 = vset.pattern.permute.xlu0 0
    %716 = vperm.xlu0 %715, %v689
    %v717 = vpop.permute.xlu0 %716
    %720 = vset.pattern.permute.xlu0 0
    %721 = vperm.xlu0 %720, %v690
    %v722 = vpop.permute.xlu0 %721
    %725 = vset.pattern.permute.xlu0 0
    %726 = vperm.xlu0 %725, %v691
    %v727 = vpop.permute.xlu0 %726
    %730 = vset.pattern.permute.xlu0 0
    %731 = vperm.xlu0 %730, %v692
    %v732 = vpop.permute.xlu0 %731
    %735 = vset.pattern.permute.xlu0 0
    %736 = vperm.xlu0 %735, %v693
    %v737 = vpop.permute.xlu0 %736
    %740 = vset.pattern.permute.xlu0 0
    %741 = vperm.xlu0 %740, %v694
    %v742 = vpop.permute.xlu0 %741
    %745 = vset.pattern.permute.xlu0 0
    %746 = vperm.xlu0 %745, %v695
    %v747 = vpop.permute.xlu0 %746
    %v749 = vperm.slane %v678, 2
    %v750 = vmul.f32 %v712, %v749
    %v751 = vmul.f32 %v717, %v749
    %v752 = vmul.f32 %v722, %v749
    %v753 = vmul.f32 %v727, %v749
    %v754 = vmul.f32 %v732, %v749
    %v755 = vmul.f32 %v737, %v749
    %v756 = vmul.f32 %v742, %v749
    %v757 = vmul.f32 %v747, %v749
    %759 = vset.pattern.permute.xlu0 0
    %760 = vperm.xlu0 %759, %v697
    %v761 = vpop.permute.xlu0 %760
    %764 = vset.pattern.permute.xlu0 0
    %765 = vperm.xlu0 %764, %v698
    %v766 = vpop.permute.xlu0 %765
    %769 = vset.pattern.permute.xlu0 0
    %770 = vperm.xlu0 %769, %v699
    %v771 = vpop.permute.xlu0 %770
    %774 = vset.pattern.permute.xlu0 0
    %775 = vperm.xlu0 %774, %v700
    %v776 = vpop.permute.xlu0 %775
    %779 = vset.pattern.permute.xlu0 0
    %780 = vperm.xlu0 %779, %v701
    %v781 = vpop.permute.xlu0 %780
    %784 = vset.pattern.permute.xlu0 0
    %785 = vperm.xlu0 %784, %v702
    %v786 = vpop.permute.xlu0 %785
    %789 = vset.pattern.permute.xlu0 0
    %790 = vperm.xlu0 %789, %v703
    %v791 = vpop.permute.xlu0 %790
    %794 = vset.pattern.permute.xlu0 0
    %795 = vperm.xlu0 %794, %v704
    %v796 = vpop.permute.xlu0 %795
    %v798 = vadd.f32 %v761, %v750
    %v799 = vadd.f32 %v766, %v751
    %v800 = vadd.f32 %v771, %v752
    %v801 = vadd.f32 %v776, %v753
    %v802 = vadd.f32 %v781, %v754
    %v803 = vadd.f32 %v786, %v755
    %v804 = vadd.f32 %v791, %v756
    %v805 = vadd.f32 %v796, %v757
    %806 = vset.pattern.permute.xlu0 1
    %807 = vperm.xlu0 %806, %v688
    %v808 = vpop.permute.xlu0 %807
    %810 = vset.pattern.permute.xlu0 1
    %811 = vperm.xlu0 %810, %v689
    %v812 = vpop.permute.xlu0 %811
    %814 = vset.pattern.permute.xlu0 1
    %815 = vperm.xlu0 %814, %v690
    %v816 = vpop.permute.xlu0 %815
    %818 = vset.pattern.permute.xlu0 1
    %819 = vperm.xlu0 %818, %v691
    %v820 = vpop.permute.xlu0 %819
    %822 = vset.pattern.permute.xlu0 1
    %823 = vperm.xlu0 %822, %v692
    %v824 = vpop.permute.xlu0 %823
    %826 = vset.pattern.permute.xlu0 1
    %827 = vperm.xlu0 %826, %v693
    %v828 = vpop.permute.xlu0 %827
    %830 = vset.pattern.permute.xlu0 1
    %831 = vperm.xlu0 %830, %v694
    %v832 = vpop.permute.xlu0 %831
    %834 = vset.pattern.permute.xlu0 1
    %835 = vperm.xlu0 %834, %v695
    %v836 = vpop.permute.xlu0 %835
    %v838 = vperm.slane %v678, 3
    %v839 = vmul.f32 %v808, %v838
    %v840 = vmul.f32 %v812, %v838
    %v841 = vmul.f32 %v816, %v838
    %v842 = vmul.f32 %v820, %v838
    %v843 = vmul.f32 %v824, %v838
    %v844 = vmul.f32 %v828, %v838
    %v845 = vmul.f32 %v832, %v838
    %v846 = vmul.f32 %v836, %v838
    %v847 = vadd.f32 %v798, %v839
    %v848 = vadd.f32 %v799, %v840
    %v849 = vadd.f32 %v800, %v841
    %v850 = vadd.f32 %v801, %v842
    %v851 = vadd.f32 %v802, %v843
    %v852 = vadd.f32 %v803, %v844
    %v853 = vadd.f32 %v804, %v845
    %v854 = vadd.f32 %v805, %v846
    %v855 = vtanh.pop %v847
    %v856 = vtanh.pop %v848
    %v857 = vtanh.pop %v849
    %v858 = vtanh.pop %v850
    %v859 = vtanh.pop %v851
    %v860 = vtanh.pop %v852
    %v861 = vtanh.pop %v853
    %v862 = vtanh.pop %v854
    %864 = vset.pattern.permute.xlu0 0
    %865 = vperm.xlu0 %864, %v708
    %v866 = vpop.permute.xlu0 %865
    %v869 = vsel %vm209, %v706, 0
    %871 = vmatpush.msra.mxu0 0.0
    %872 = vmatpush.msra.mxu0 0.0
    %873 = vmatpush.msra.mxu0 0.0
    %874 = vmatpush.msra.mxu0 0.0
    %875 = vmatpush.msra.mxu0 0.0
    %876 = vmatpush.msra.mxu0 0.0
    %877 = vmatpush.msra.mxu0 0.0
    %878 = vmatpush.msra.mxu0 0.0
    %879 = vmatpush.msra.mxu0 %v862
    %880 = vmatpush.msra.mxu0 %v861
    %881 = vmatpush.msra.mxu0 %v860
    %882 = vmatpush.msra.mxu0 %v859
    %883 = vmatpush.msra.mxu0 %v858
    %884 = vmatpush.msra.mxu0 %v857
    %885 = vmatpush.msra.mxu0 %v856
    %886 = vmatpush.msra.mxu0 %v855
    %887 = vmatmul.f32.gmra.mxu0 %v869
    %v888 = vpop.f32.mrf.mxu0
    %v889 = vadd.f32 %v866, %v888
    %890 = vdwg.mxu0
    %v891 = vmul.f32 %v889, 1.442695
    %v892 = vpow.pop %v891
    %v893 = vmul.f32 %v459, %v892
    %v895 = vrot.slane %v889, 2
    %v897 = vadd.f32 %v893, %v895
    %v898 = vsel %vm240, %v889, 0.0
    %v899 = vrot.slane %v898, 4
    %v900 = vadd.f32 %v898, %v899
    %v901 = vrot.slane %v900, 2
    %v902 = vadd.f32 %v900, %v901
    %v903 = vrot.slane %v902, 1
    %v904 = vadd.f32 %v902, %v903
    %v905 = vadd.f32 %v686, %v904
    %v906 = vsel %vm240, %v897, %v678
    %v907 = vld [vmem:[%s5] sm:$0xf]
    %909 = vset.pattern.permute.xlu0 0
    %910 = vperm.xlu0 %909, %v907
    %v911 = vpop.permute.xlu0 %910
    %v913 = vsub.f32 %v906, %v911
    %v914 = vld [vmem:[%s6] sm:$0xf]
    %916 = vset.pattern.permute.xlu0 0
    %917 = vperm.xlu0 %916, %v914
    %v918 = vpop.permute.xlu0 %917
    %v920 = vperm.slane %v913, 0
    %v921 = vmul.f32 %v918, %v920
    %922 = vset.pattern.permute.xlu0 1
    %923 = vperm.xlu0 %922, %v914
    %v924 = vpop.permute.xlu0 %923
    %v926 = vperm.slane %v913, 1
    %v927 = vmul.f32 %v924, %v926
    %v928 = vadd.f32 %v921, %v927
    %929 = vset.pattern.permute.xlu0 2
    %930 = vperm.xlu0 %929, %v914
    %v931 = vpop.permute.xlu0 %930
    %v933 = vperm.slane %v913, 2
    %v934 = vmul.f32 %v931, %v933
    %v935 = vadd.f32 %v928, %v934
    %936 = vset.pattern.permute.xlu0 3
    %937 = vperm.xlu0 %936, %v914
    %v938 = vpop.permute.xlu0 %937
    %v940 = vperm.slane %v913, 3
    %v941 = vmul.f32 %v938, %v940
    %v942 = vadd.f32 %v935, %v941
    %v943 = vmul.f32 %v942, %v913
    %vm944 = vcmask 1043456
    %v945 = vsel %vm944, %v943, 0.0
    %v946 = vrot.slane %v945, 4
    %v947 = vadd.f32 %v945, %v946
    %v948 = vrot.slane %v947, 2
    %v949 = vadd.f32 %v947, %v948
    %v950 = vrot.slane %v949, 1
    %v951 = vadd.f32 %v949, %v950
    %v952 = vmul.f32 %v951, -0.5
    %s953 = sld [smem:[#allocation2]]
    %v954 = vstv %s953
    %v955 = vadd.f32 %v952, %v954
    %v956 = vsel %vm944, %v906, %v955
    %vm957 = vcmask 1044480
    %v958 = vsel %vm957, %v956, %v905
    %vm959 = vcmask 1045504
    %v960 = vsel %vm959, %v958, 0.0
    %961 = vst [vmem:[#allocation3] sm:$0xff] %v960
    // Predicated region
    $region34: #{tpu_custom_call.1} parent=1 // pred_check
      _
    $region35: #{tpu_custom_call.1} parent=1 // pred_check_branch
      %963 = sbr.rel (0) target = $region37
    $region36: #{tpu_custom_call.1} parent=1 // pred_region
      %965 = vsyncadd [#allocation4], 0
      %s967 = sshll.u32 [#allocation3], 4
      %s968 = int_to_ptr.vmem [resolvable:$true] %s967
      %s969 = sshll.u32 %s8, 4
      %s970 = int_to_ptr.hbm [resolvable:$true] %s969
      %972 = dma.vmem_to_hbm [thread:$0]  %s968, 128, %s970, [#allocation4]
    $region37: #{tpu_custom_call.1} parent=1 // pred_fallthru
      _
    // Predicated region
    $region38: #{tpu_custom_call.1} parent=1 // pred_check
      _
    $region39: #{tpu_custom_call.1} parent=1 // pred_check_branch
      %974 = sbr.rel (0) target = $region41
    $region40: #{tpu_custom_call.1} parent=1 // pred_region
      %976 = dma.done [#allocation4], 128
    $region41: #{tpu_custom_call.1} parent=1 // pred_fallthru
      _
    %977 = vsyncpa [#allocation4], 1

</llo_original>
